<compile_context>
chip_gen: v7x
topology: tpu7x:2x2x1
jax: 0.10.0
libtpu: 0.0.40
codegen_flags: <defaults>
</compile_context>

<pallas_src>
import functools

import jax
import jax.numpy as jnp
from jax import lax
from jax.experimental import pallas as pl
from jax.experimental.pallas import tpu as pltpu


def _round_up(v, m):
    return ((v + m - 1) // m) * m


def _sublane_multiple(dtype):
    # f32 -> 8 rows, bf16 -> 16, int8/fp8 -> 32 (packed sublanes).
    return max(8, 32 // jnp.dtype(dtype).itemsize)


def _vmem_capacity_bytes():
    try:
        return int(pltpu.get_tpu_info().vmem_capacity_bytes)
    except Exception:
        return 64 << 20  # conservative fallback: v7x per-TensorCore VMEM


def _vmem_estimate(tn, h, e, x_item, w_item, out_lanes):
    """Per-step VMEM footprint, including in-kernel (TN, E) temporaries."""
    e_lanes = max(_round_up(e, 128), 128)
    return (2 * tn * h * x_item              # double-buffered x tile
            + 2 * (h * e + e) * w_item       # resident gate weight + bias (2 bufs)
            + 2 * tn * out_lanes * 4         # double-buffered lane-dense output slab
            + 6 * tn * e_lanes * 4           # logits / e / iota / masks / top-k work
            + (4 << 20))                     # compiler scratch headroom


def router_kernel(x_ref, w_ref, b_ref, out_ref, *, top_k, num_experts, out_lanes):
    x = x_ref[...]                                        # (TN, H)  f32 or bf16
    w = w_ref[...]                                        # (H, E)   resident
    b = b_ref[...].astype(jnp.float32)                    # (1, E)   resident

    # MXU matmul, f32-accumulated (native bf16 input path on v6e/v7x).
    logits = jnp.dot(x, w, preferred_element_type=jnp.float32) + b   # (TN, E)
    tn = logits.shape[0]

    # Softmax pieces; never materialize the normalized (TN, E) probabilities.
    m = jnp.max(logits, axis=-1, keepdims=True)                       # (TN, 1)
    e = jnp.exp(logits - m)                                           # (TN, E)
    denom = jnp.sum(e, axis=-1, keepdims=True)                        # (TN, 1)
    inv = 1.0 / denom                                                 # exact divide, tiny

    col = lax.broadcasted_iota(jnp.int32, (tn, num_experts), dimension=1)

    # Iterative top-k directly on e (monotonic in the probabilities, so the
    # selection/ordering matches torch.topk on softmax(logits); ties break on
    # the first index).  e is reused as the work buffer.
    work = e
    score_cols = []
    idx_cols = []
    for _ in range(top_k):
        best = jnp.max(work, axis=-1, keepdims=True)                  # (TN, 1)
        best_idx = jnp.min(jnp.where(work == best, col, num_experts),
                           axis=-1, keepdims=True)
        # Guard: all-NaN rows would otherwise emit index == num_experts.
        best_idx = jnp.minimum(best_idx, num_experts - 1).astype(jnp.int32)
        score_cols.append(best * inv)                                 # softmax score
        idx_cols.append(best_idx.astype(jnp.float32))                 # exact for E < 2**24
        work = jnp.where(col == best_idx, -1.0, work)                 # e >= 0, -1 never wins

    # Lane-dense output slab: scores | indices | zero padding, one full-width
    # unmasked store per grid step.
    pad = jnp.zeros((tn, out_lanes - 2 * top_k), jnp.float32)
    out_ref[...] = jnp.concatenate(score_cols + idx_cols + [pad], axis=-1)


def router_forward(x, w, b, top_k=1, tn=None, cast_inputs_to_bf16=False,
                   core_parallel=False, interpret=False):
    """x: (N, H); w: (H, E); b: (E,).  Returns (scores f32 (N, K), indices i32 (N, K))."""
    n, h = x.shape
    e = w.shape[1]

    if cast_inputs_to_bf16 and x.dtype == jnp.float32:
        # Bandwidth optimization: halves the bytes streamed for x / W; matmul
        # still accumulates in f32 and softmax / top-k stay f32.
        x = x.astype(jnp.bfloat16)
        w = w.astype(jnp.bfloat16)

    x_item = jnp.dtype(x.dtype).itemsize
    w_item = jnp.dtype(w.dtype).itemsize
    sub = _sublane_multiple(x.dtype)
    out_lanes = max(128, _round_up(2 * top_k, 128))

    # Generation-aware VMEM budget (v5e/v6e: 128 MiB, v7x: 64 MiB per TC).
    vmem_cap = _vmem_capacity_bytes()
    budget = max(int(0.75 * vmem_cap), 16 << 20)

    if tn is None:
        tn = sub
        for cand in (1024, 768, 512, 384, 256, 128, 64, 32, 16, 8):
            if cand % sub:
                continue
            if _vmem_estimate(cand, h, e, x_item, w_item, out_lanes) <= budget:
                tn = cand
                break
    tn_eff = min(_round_up(tn, sub), _round_up(max(n, 1), sub))

    n_pad = _round_up(n, tn_eff)
    grid_n = n_pad // tn_eff
    if core_parallel and grid_n % 2 != 0:
        # 2-TC sharding wants an even number of grid steps.
        n_pad += tn_eff
        grid_n += 1
    x_p = jnp.pad(x, ((0, n_pad - n), (0, 0))) if n_pad != n else x

    est = _vmem_estimate(tn_eff, h, e, x_item, w_item, out_lanes)
    vmem_limit = int(min(max(est, 16 << 20), max(int(0.9 * vmem_cap), 16 << 20)))

    semantics = (pltpu.CORE_PARALLEL if core_parallel else "parallel",)

    kernel = functools.partial(router_kernel, top_k=top_k, num_experts=e,
                               out_lanes=out_lanes)
    out = pl.pallas_call(
        kernel,
        out_shape=jax.ShapeDtypeStruct((n_pad, out_lanes), jnp.float32),
        grid=(grid_n,),
        in_specs=[
            pl.BlockSpec((tn_eff, h), lambda i: (i, 0)),   # streamed token tile
            pl.BlockSpec((h, e), lambda i: (0, 0)),        # resident gate weight
            pl.BlockSpec((1, e), lambda i: (0, 0)),        # resident gate bias
        ],
        out_specs=pl.BlockSpec((tn_eff, out_lanes), lambda i: (i, 0)),
        compiler_params=pltpu.CompilerParams(
            dimension_semantics=semantics,
            vmem_limit_bytes=vmem_limit,
        ),
        interpret=interpret,
    )(x_p, w, b.reshape(1, e))

    scores = out[:n, :top_k]
    # Indices were stored as exact small-integer f32 values; cast back.
    idx = out[:n, top_k:2 * top_k].astype(jnp.int32)
    return scores, idx


def router_reference(x, w, b, top_k=1):
    logits = jnp.dot(x.astype(jnp.float32), w.astype(jnp.float32),
                     precision=lax.Precision.HIGHEST,
                     preferred_element_type=jnp.float32)
    logits = logits + b.astype(jnp.float32)[None, :]
    probs = jax.nn.softmax(logits, axis=-1)
    scores, idx = lax.top_k(probs, top_k)
    return scores, idx.astype(jnp.int32)


if __name__ == "__main__":
    batch, seq, hidden_dim, num_experts = 2, 8, 32, 8

    key = jax.random.PRNGKey(0)
    kx, kw, kb = jax.random.split(key, 3)

    # deterministic param init (mimics nn.Linear uniform(-1/sqrt(H), 1/sqrt(H)))
    bound = 1.0 / float(jnp.sqrt(hidden_dim))
    w = jax.random.uniform(kw, (hidden_dim, num_experts), jnp.float32, -bound, bound)
    b = jax.random.uniform(kb, (num_experts,), jnp.float32, -bound, bound)

    x = jax.random.normal(kx, (batch, seq, hidden_dim), jnp.float32)
    x_tokens = x.reshape(batch * seq, hidden_dim)   # flatten leading dims

    # top_k=1 (module default), top_k=2 (iterative loop), and a forced
    # multi-step grid (tn=8) to exercise streaming + resident weights.
    for top_k, tile in ((1, None), (2, None), (2, 8)):
        scores, idx = router_forward(x_tokens, w, b, top_k=top_k, tn=tile)
        jax.block_until_ready((scores, idx))
        ref_s, ref_i = router_reference(x_tokens, w, b, top_k=top_k)
        assert scores.shape == (batch * seq, top_k)
        assert idx.shape == (batch * seq, top_k)
        assert jnp.allclose(scores, ref_s, atol=1e-5, rtol=1e-5)
        assert jnp.array_equal(idx, ref_i)

    # Ragged token count (padding path: N=20 -> tile rounds to 24).
    x_ragged = jax.random.normal(jax.random.PRNGKey(1), (20, hidden_dim), jnp.float32)
    s_r, i_r = router_forward(x_ragged, w, b, top_k=2)
    jax.block_until_ready((s_r, i_r))
    ref_s, ref_i = router_reference(x_ragged, w, b, top_k=2)
    assert jnp.allclose(s_r, ref_s, atol=1e-5, rtol=1e-5)
    assert jnp.array_equal(i_r, ref_i)

    # bf16 fast path (halves HBM bytes for x / W; matmul still f32-accumulated).
    s_bf, i_bf = router_forward(x_tokens, w, b, top_k=2, cast_inputs_to_bf16=True)
    jax.block_until_ready((s_bf, i_bf))
    assert s_bf.shape == (batch * seq, 2) and i_bf.shape == (batch * seq, 2)
    assert bool(jnp.all(jnp.isfinite(s_bf)))
    assert bool(jnp.all((i_bf >= 0) & (i_bf < num_experts)))

    # TODO(synk): enable core_parallel=True (pltpu.CORE_PARALLEL) by default on
    # v7x once 2-TC parts are the target; kept opt-in so single-TC chips run clean.
    print("KERNEL_OK")
</pallas_src>

<mosaic_0001>
module attributes {stable_mosaic.version = 11 : i64} {
  func.func @router_kernel(%arg0: i32, %arg1: memref<16x32xf32, #tpu.memory_space<vmem>>, %arg2: memref<32x8xf32, #tpu.memory_space<vmem>>, %arg3: memref<1x8xf32, #tpu.memory_space<vmem>>, %arg4: memref<16x128xf32, #tpu.memory_space<vmem>>) attributes {dimension_semantics = [#tpu.dimension_semantics<parallel>], iteration_bounds = array<i64: 1>, scalar_prefetch = 0 : i64, scratch_operands = 0 : i64, tpu.core_type = #tpu.core_type<tc>, window_params = [{transform_indices = @transform_0, window_bounds = array<i64: 16, 32>}, {pipeline_mode = #tpu.pipeline_mode<synchronous>, transform_indices = @transform_1, window_bounds = array<i64: 32, 8>}, {pipeline_mode = #tpu.pipeline_mode<synchronous>, transform_indices = @transform_2, window_bounds = array<i64: 1, 8>}, {transform_indices = @transform_3, window_bounds = array<i64: 16, 128>}]} {
    %c0 = arith.constant 0 : index
    %c0_0 = arith.constant 0 : index
    %0 = vector.load %arg1[%c0, %c0_0] : memref<16x32xf32, #tpu.memory_space<vmem>>, vector<16x32xf32>
    %c0_1 = arith.constant 0 : index
    %c0_2 = arith.constant 0 : index
    %1 = vector.load %arg2[%c0_1, %c0_2] : memref<32x8xf32, #tpu.memory_space<vmem>>, vector<32x8xf32>
    %c0_3 = arith.constant 0 : index
    %c0_4 = arith.constant 0 : index
    %2 = vector.load %arg3[%c0_3, %c0_4] : memref<1x8xf32, #tpu.memory_space<vmem>>, vector<1x8xf32>
    %cst = arith.constant dense<0.000000e+00> : vector<16x8xf32>
    %3 = tpu.matmul %0, %1, %cst {dimension_numbers = #tpu.dot_dimension_numbers<[1], [0], [0], [1], [0, 0, 1, 1], [], []>} : vector<16x32xf32>, vector<32x8xf32>, vector<16x8xf32> -> vector<16x8xf32>
    %4 = vector.broadcast %2 : vector<1x8xf32> to vector<16x8xf32>
    %5 = arith.addf %3, %4 : vector<16x8xf32>
    %cst_5 = arith.constant dense<0xFF800000> : vector<16xf32>
    %6 = vector.multi_reduction <maximumf>, %5, %cst_5 [1] : vector<16x8xf32> to vector<16xf32>
    %7 = vector.shape_cast %6 : vector<16xf32> to vector<16x1xf32>
    %8 = vector.broadcast %7 : vector<16x1xf32> to vector<16x8xf32>
    %9 = arith.subf %5, %8 : vector<16x8xf32>
    %10 = math.exp %9 : vector<16x8xf32>
    %cst_6 = arith.constant dense<0.000000e+00> : vector<16xf32>
    %11 = vector.multi_reduction <add>, %10, %cst_6 [1] : vector<16x8xf32> to vector<16xf32>
    %12 = vector.shape_cast %11 : vector<16xf32> to vector<16x1xf32>
    %cst_7 = arith.constant 1.000000e+00 : f32
    %13 = vector.broadcast %cst_7 : f32 to vector<16x1xf32>
    %14 = arith.divf %13, %12 : vector<16x1xf32>
    %15 = tpu.iota {dimensions = array<i32: 1>} : vector<16x8xi32>
    %cst_8 = arith.constant dense<0xFF800000> : vector<16xf32>
    %16 = vector.multi_reduction <maximumf>, %10, %cst_8 [1] : vector<16x8xf32> to vector<16xf32>
    %17 = vector.shape_cast %16 : vector<16xf32> to vector<16x1xf32>
    %18 = vector.broadcast %17 : vector<16x1xf32> to vector<16x8xf32>
    %19 = arith.cmpf oeq, %10, %18 : vector<16x8xf32>
    %c8_i32 = arith.constant 8 : i32
    %20 = vector.broadcast %c8_i32 : i32 to vector<16x8xi32>
    %21 = arith.select %19, %15, %20 : vector<16x8xi1>, vector<16x8xi32>
    %cst_9 = arith.constant dense<2147483647> : vector<16xi32>
    %22 = vector.multi_reduction <minsi>, %21, %cst_9 [1] : vector<16x8xi32> to vector<16xi32>
    %23 = vector.shape_cast %22 : vector<16xi32> to vector<16x1xi32>
    %c7_i32 = arith.constant 7 : i32
    %24 = vector.broadcast %c7_i32 : i32 to vector<16x1xi32>
    %25 = arith.minsi %23, %24 : vector<16x1xi32>
    %26 = arith.mulf %17, %14 : vector<16x1xf32>
    %27 = arith.sitofp %25 : vector<16x1xi32> to vector<16x1xf32>
    %cst_10 = arith.constant 0.000000e+00 : f32
    %28 = vector.broadcast %cst_10 : f32 to vector<16x126xf32>
    %29 = tpu.concatenate %26, %27, %28 in 1 : vector<16x1xf32>, vector<16x1xf32>, vector<16x126xf32> -> vector<16x128xf32>
    %c0_11 = arith.constant 0 : index
    %c0_12 = arith.constant 0 : index
    %30 = vector.load %arg4[%c0_11, %c0_12] : memref<16x128xf32, #tpu.memory_space<vmem>>, vector<16x128xf32>
    tpu.vector_store %arg4[%c0_11, %c0_12], %29 {strides = array<i32>} : memref<16x128xf32, #tpu.memory_space<vmem>>, vector<16x128xf32>,
    return
  }
  func.func @transform_0(%arg0: i32) -> (i32, i32) {
    %c0_i32 = arith.constant 0 : i32
    %c0_i32_0 = arith.constant 0 : i32
    return %arg0, %c0_i32 : i32, i32
  }
  func.func @transform_1(%arg0: i32) -> (i32, i32) {
    %c0_i32 = arith.constant 0 : i32
    %c0_i32_0 = arith.constant 0 : i32
    %c0_i32_1 = arith.constant 0 : i32
    return %c0_i32, %c0_i32_0 : i32, i32
  }
  func.func @transform_2(%arg0: i32) -> (i32, i32) {
    %c0_i32 = arith.constant 0 : i32
    %c0_i32_0 = arith.constant 0 : i32
    %c0_i32_1 = arith.constant 0 : i32
    return %c0_i32, %c0_i32_0 : i32, i32
  }
  func.func @transform_3(%arg0: i32) -> (i32, i32) {
    %c0_i32 = arith.constant 0 : i32
    %c0_i32_0 = arith.constant 0 : i32
    return %arg0, %c0_i32 : i32, i32
  }
}

</mosaic_0001>

<llo_original>
// kernel: tpu_custom_call.1
$region0: #{tpu_custom_call.1}
  #allocation0 [shape = 'u32[]', space=smem, size = 0x4, offset = 0x4, fixed_abs, tag = 'smem constant byte address 0x4 - core index']
  #allocation1 [shape = 'u32[144,128]{1,0:T(1,128)}', space=vmem, size = 0x12000, scoped, tag = 'internal scratch']
  %s0 = inlined_call_operand.vmem [shape: f32[16,32], index: 0, kind: input, shape index: {}]
  %s1 = inlined_call_operand.vmem [shape: f32[32,8], index: 1, kind: input, shape index: {}]
  %s2 = inlined_call_operand.vmem [shape: f32[1,8], index: 2, kind: input, shape index: {}]
  %s3 = inlined_call_operand.hbm [shape: f32[16,128], index: 3, kind: output, shape index: {}]
  %s4 = sld [smem:[#allocation0]]
  $region22: #{tpu_custom_call.1} parent=0
    _
  %s6 = ssub.s32 1, %s4
  %s7 = scalar_select 0, %s6, %s4
  $region1: #{tpu_custom_call.1} parent=0
    #allocation2 [shape = 'u8[8192]{0}', space=vmem, size = 0x2000, scoped, tag = 'output window, operand 0, single buffered']
    #allocation3 [shape = 's32[1]{0}', space=sflag, size = 0x4, scoped, tag = 'scoped memory for tpu_custom_call.1']
    %8 = vsyncpa [#allocation3], 0
    // Predicated region
    $region2: #{tpu_custom_call.1} parent=1 // pred_check
      _
    $region3: #{tpu_custom_call.1} parent=1 // pred_check_branch
      %10 = sbr.rel (0) target = $region5
    $region4: #{tpu_custom_call.1} parent=1 // pred_region
      _
    $region5: #{tpu_custom_call.1} parent=1 // pred_fallthru
      _
    // Predicated region
    $region6: #{tpu_custom_call.1} parent=1 // pred_check
      _
    $region7: #{tpu_custom_call.1} parent=1 // pred_check_branch
      %12 = sbr.rel (0) target = $region9
    $region8: #{tpu_custom_call.1} parent=1 // pred_region
      _
    $region9: #{tpu_custom_call.1} parent=1 // pred_fallthru
      _
    // Predicated region
    $region10: #{tpu_custom_call.1} parent=1 // pred_check
      _
    $region11: #{tpu_custom_call.1} parent=1 // pred_check_branch
      %14 = sbr.rel (0) target = $region13
    $region12: #{tpu_custom_call.1} parent=1 // pred_region
      _
    $region13: #{tpu_custom_call.1} parent=1 // pred_fallthru
      _
    %v15 = vld [vmem:[%s0] sm:$0xff]
    %v16 = vld [vmem:[%s0 + $0x8] sm:$0xff]
    %v17 = vld [vmem:[%s1] sm:$0xff]
    %v18 = vld [vmem:[%s1 + $0x8] sm:$0xff]
    %v19 = vld [vmem:[%s1 + $0x10] sm:$0xff]
    %v20 = vld [vmem:[%s1 + $0x18] sm:$0xff]
    %v21 = vld [vmem:[%s2] sm:$0x1]
    %v23 = vlaneseq
    %v24 = vshrl.u32 %v23, 7
    %v25 = vsub.s32 0, %v24
    %v26 = vrot.slane %v21, %v25
    %vm28 = vcmask 261120
    %v30 = vsel %vm28, %v15, 0
    %v33 = vsel %vm28, %v16, 0
    %35 = vmatprep.subr.mxu0 0.0
    %36 = vmatpush1.msra.mxu0 %v17
    %37 = vmatprep.subr.mxu0 0.0
    %38 = vmatpush1.msra.mxu0 %v18
    %39 = vmatprep.subr.mxu0 0.0
    %40 = vmatpush1.msra.mxu0 %v19
    %41 = vmatprep.subr.mxu0 0.0
    %42 = vmatpush1.msra.mxu0 %v20
    %43 = vmatprep.subr.mxu0 0.0
    %44 = vmatpush1.msra.mxu0 0.0
    %45 = vmatprep.subr.mxu0 0.0
    %46 = vmatpush1.msra.mxu0 0.0
    %47 = vmatprep.subr.mxu0 0.0
    %48 = vmatpush1.msra.mxu0 0.0
    %49 = vmatprep.subr.mxu0 0.0
    %50 = vmatpush1.msra.mxu0 0.0
    %51 = vmatprep.subr.mxu0 0.0
    %52 = vmatpush1.msra.mxu0 0.0
    %53 = vmatprep.subr.mxu0 0.0
    %54 = vmatpush1.msra.mxu0 0.0
    %55 = vmatprep.subr.mxu0 0.0
    %56 = vmatpush1.msra.mxu0 0.0
    %57 = vmatprep.subr.mxu0 0.0
    %58 = vmatpush1.msra.mxu0 0.0
    %59 = vmatprep.subr.mxu0 0.0
    %60 = vmatpush1.msra.mxu0 0.0
    %61 = vmatprep.subr.mxu0 0.0
    %62 = vmatpush1.msra.mxu0 0.0
    %63 = vmatprep.subr.mxu0 0.0
    %64 = vmatpush1.msra.mxu0 0.0
    %65 = vmatprep.subr.mxu0 0.0
    %66 = vmatpush1.msra.mxu0 0.0
    %67 = vmatprep.subr.mxu0 0.0
    %68 = vmatpush1.msra.mxu0 0.0
    %69 = vmatprep.subr.mxu0 0.0
    %70 = vmatpush1.msra.mxu0 0.0
    %71 = vmatprep.subr.mxu0 0.0
    %72 = vmatpush1.msra.mxu0 0.0
    %73 = vmatprep.subr.mxu0 0.0
    %74 = vmatpush1.msra.mxu0 0.0
    %75 = vmatprep.subr.mxu0 0.0
    %76 = vmatpush1.msra.mxu0 0.0
    %77 = vmatprep.subr.mxu0 0.0
    %78 = vmatpush1.msra.mxu0 0.0
    %79 = vmatprep.subr.mxu0 0.0
    %80 = vmatpush1.msra.mxu0 0.0
    %81 = vmatprep.subr.mxu0 0.0
    %82 = vmatpush1.msra.mxu0 0.0
    %83 = vmatprep.subr.mxu0 0.0
    %84 = vmatpush1.msra.mxu0 0.0
    %85 = vmatprep.subr.mxu0 0.0
    %86 = vmatpush1.msra.mxu0 0.0
    %87 = vmatprep.subr.mxu0 0.0
    %88 = vmatpush1.msra.mxu0 0.0
    %89 = vmatprep.subr.mxu0 0.0
    %90 = vmatpush1.msra.mxu0 0.0
    %91 = vmatprep.subr.mxu0 0.0
    %92 = vmatpush1.msra.mxu0 0.0
    %93 = vmatprep.subr.mxu0 0.0
    %94 = vmatpush1.msra.mxu0 0.0
    %95 = vmatprep.subr.mxu0 0.0
    %96 = vmatpush1.msra.mxu0 0.0
    %97 = vmatprep.subr.mxu0 0.0
    %98 = vmatpush1.msra.mxu0 0.0
    %99 = vmatprep.mubr.f32.mxu0 0.0
    %100 = vmatmul.mubr.f32.gmra.mrb[0].mxu0 %v30
    %v101 = vpop.f32.mrb[0].mxu0
    %v102 = vadd.f32 %v26, %v101
    %v103 = vpop.f32.mrb[0].mxu0
    %104 = vmatprep.mubr.f32.mxu0 0.0
    %105 = vmatmul.mubr.f32.gmra.mrb[0].mxu0 %v33
    %v106 = vpop.f32.mrb[0].mxu0
    %v107 = vadd.f32 %v26, %v106
    %v108 = vpop.f32.mrb[0].mxu0
    %109 = vdwg.mxu0
    %vm110 = vcmask 64512
    %v111 = vsel %vm110, %v102, -inf
    %112 = vmax.xlane.f32.xlu0 %v111
    %v113 = vpop.xlane.xlu0 %112
    %v114 = vsel %vm110, %v107, -inf
    %115 = vmax.xlane.f32.xlu0 %v114
    %v116 = vpop.xlane.xlu0 %115
    %v117 = vsub.f32 %v102, %v113
    %v118 = vsub.f32 %v107, %v116
    %v119 = vmul.f32 %v117, 1.442695
    %v120 = vpow.pop %v119
    %v121 = vmul.f32 %v118, 1.442695
    %v122 = vpow.pop %v121
    %v123 = vsel %vm110, %v120, 0.0
    %124 = vadd.xlane.f32.xlu0 %v123
    %v125 = vpop.xlane.xlu0 %124
    %v126 = vsel %vm110, %v122, 0.0
    %127 = vadd.xlane.f32.xlu0 %v126
    %v128 = vpop.xlane.xlu0 %127
    %v129 = vrcp.pop %v125
    %v130 = vmul.f32 1.0, %v129
    %v131 = vrcp.pop %v128
    %v132 = vmul.f32 1.0, %v131
    %v133 = vlaneseq
    %v134 = vand.u32 %v133, 127
    %v135 = vsel %vm110, %v120, -inf
    %136 = vmax.xlane.f32.xlu0 %v135
    %v137 = vpop.xlane.xlu0 %136
    %v138 = vsel %vm110, %v122, -inf
    %139 = vmax.xlane.f32.xlu0 %v138
    %v140 = vpop.xlane.xlu0 %139
    %vm141 = vcmp.eq.f32.partialorder %v120, %v137
    %vm142 = vcmp.eq.f32.partialorder %v122, %v140
    %v143 = vsel %vm141, %v134, 8
    %v144 = vsel %vm142, %v134, 8
    %v145 = vsel %vm110, %v143, 2147483647
    %v146 = vand.u32 %v145, 65535
    %v147 = vshra.s32 %v145, 16
    %v148 = vcvt.s32.f32 %v146
    %v149 = vcvt.s32.f32 %v147
    %150 = vmin.xlane.f32.xlu0 %v149
    %v151 = vpop.xlane.xlu0 %150
    %vm152 = vcmp.eq.f32.partialorder %v149, %v151
    %v153 = vsel %vm152, %v148, inf
    %154 = vmin.xlane.f32.xlu0 %v153
    %v155 = vpop.xlane.xlu0 %154
    %v156 = vcvt.f32.s32 %v155
    %v157 = vcvt.f32.s32 %v151
    %v158 = vshll.u32 %v157, 16
    %v159 = vadd.s32 %v158, %v156
    %v160 = vsel %vm110, %v144, 2147483647
    %v161 = vand.u32 %v160, 65535
    %v162 = vshra.s32 %v160, 16
    %v163 = vcvt.s32.f32 %v161
    %v164 = vcvt.s32.f32 %v162
    %165 = vmin.xlane.f32.xlu0 %v164
    %v166 = vpop.xlane.xlu0 %165
    %vm167 = vcmp.eq.f32.partialorder %v164, %v166
    %v168 = vsel %vm167, %v163, inf
    %169 = vmin.xlane.f32.xlu0 %v168
    %v170 = vpop.xlane.xlu0 %169
    %v171 = vcvt.f32.s32 %v170
    %v172 = vcvt.f32.s32 %v166
    %v173 = vshll.u32 %v172, 16
    %v174 = vadd.s32 %v173, %v171
    %vm175 = vcmp.lt.s32.totalorder %v159, 7
    %v176 = vsel %vm175, %v159, 7
    %vm177 = vcmp.lt.s32.totalorder %v174, 7
    %v178 = vsel %vm177, %v174, 7
    %v179 = vmul.f32 %v137, %v130
    %v180 = vmul.f32 %v140, %v132
    %v181 = vcvt.s32.f32 %v176
    %v182 = vcvt.s32.f32 %v178
    %vm183 = vcmask 7168
    %v184 = vsel %vm183, %v179, %v181
    %v185 = vsel %vm183, %v180, %v182
    %vm186 = vcmask 15360
    %v187 = vsel %vm186, %v184, 0.0
    %v188 = vsel %vm186, %v185, 0.0
    %189 = vst [vmem:[#allocation2] sm:$0xff] %v187
    %190 = vst [vmem:[#allocation2 + $0x8] sm:$0xff] %v188
    // Predicated region
    $region14: #{tpu_custom_call.1} parent=1 // pred_check
      _
    $region15: #{tpu_custom_call.1} parent=1 // pred_check_branch
      %192 = sbr.rel (0) target = $region17
    $region16: #{tpu_custom_call.1} parent=1 // pred_region
      %s194 = ssub.s32 256, 256
      %195 = vsyncadd [#allocation3], %s194
      %s196 = sshll.u32 [#allocation2], 4
      %s197 = int_to_ptr.vmem [resolvable:$true] %s196
      %202 = dma.vmem_to_hbm [thread:$0]  %s197, 256, %s3, [#allocation3], 128, 128, 8
    $region17: #{tpu_custom_call.1} parent=1 // pred_fallthru
      _
    // Predicated region
    $region18: #{tpu_custom_call.1} parent=1 // pred_check
      _
    $region19: #{tpu_custom_call.1} parent=1 // pred_check_branch
      %204 = sbr.rel (0) target = $region21
    $region20: #{tpu_custom_call.1} parent=1 // pred_region
      %205 = dma.done [#allocation3], 256
    $region21: #{tpu_custom_call.1} parent=1 // pred_fallthru
      _
    %206 = vsyncpa [#allocation3], 1

</llo_original>
